<compile_context>
chip_gen: v5e
topology: v5e:2x2
jax: 0.10.0
libtpu: 0.0.40
codegen_flags: <defaults>
</compile_context>

<pallas_src>
import math

import numpy as np
import jax
import jax.numpy as jnp
from jax.experimental import pallas as pl
from jax.experimental.pallas import tpu as pltpu


_VMEM_BUDGET_BYTES = 24 * 1024 * 1024   # tile-selection budget (safe on v7x's 64 MiB)
_VMEM_LIMIT_BYTES = 48 * 1024 * 1024    # explicit scoped-VMEM limit (> 16/32 MiB defaults)


def _round_up(x, n):
    return -(-x // n) * n


def _mlp_kernel_fused(x_ref, w1_ref, b1_ref, w2_ref, b2_ref, o_ref):
    """Both weights fully resident in VMEM; single grid axis over M tiles."""
    x = x_ref[...].astype(jnp.bfloat16)              # in-kernel cast (hides under MXU)
    h = jnp.dot(x, w1_ref[...], preferred_element_type=jnp.float32)
    h = h + b1_ref[...]                              # fc1 bias, f32 epilogue
    h = jnp.maximum(h, 0.3 * h)                      # LeakyReLU(negative_slope=0.3)
    # Dropout(p=0.0) -> identity.
    o = jnp.dot(h.astype(jnp.bfloat16), w2_ref[...],
                preferred_element_type=jnp.float32)
    o_ref[...] = (o + b2_ref[...]).astype(o_ref.dtype)


def _mlp_kernel_htiled(x_ref, w1_ref, b1_ref, w2_ref, b2_ref, o_ref, acc_ref):
    """Hidden dim tiled: grid = (M tiles, H tiles); fc2 accumulated in f32 scratch."""
    j = pl.program_id(1)

    @pl.when(j == 0)
    def _():
        acc_ref[...] = jnp.zeros_like(acc_ref)

    x = x_ref[...].astype(jnp.bfloat16)
    h = jnp.dot(x, w1_ref[...], preferred_element_type=jnp.float32)
    h = h + b1_ref[...]                              # bias/act valid per hidden tile
    h = jnp.maximum(h, 0.3 * h)
    acc_ref[...] += jnp.dot(h.astype(jnp.bfloat16), w2_ref[...],
                            preferred_element_type=jnp.float32)

    @pl.when(j == pl.num_programs(1) - 1)
    def _():
        o_ref[...] = (acc_ref[...] + b2_ref[...]).astype(o_ref.dtype)


def _choose_tiles(m, d_in, hidden, d_out, out_bytes, tm_req):
    """Pick (row tile, hidden tile) under a conservative VMEM budget."""
    # Row tile: multiple of 16 (bf16 sublane packing), capped at m.
    tm = max(16, min(_round_up(tm_req, 16), _round_up(m, 16)))
    # Keep >= 2 M tiles when m is big enough so v7x's two TensorCores both get
    # work on the "parallel" axis (extra step is ~0.35 us on v5e/v6e).
    if m >= 256 and pl.cdiv(m, tm) < 2:
        tm = _round_up(pl.cdiv(m, 2), 16)

    def vmem_est(tm_, th_):
        return (2 * tm_ * d_in * 4                    # x window (f32, double-buffered)
                + 2 * tm_ * d_out * out_bytes         # out window (double-buffered)
                + 2 * (d_in * th_ + th_ * d_out) * 2  # W1/W2 tiles (bf16, 2 bufs)
                + 2 * (th_ + d_out) * 4               # biases (f32)
                + tm_ * th_ * 4                       # f32 fc1 intermediate
                + tm_ * d_out * 4)                    # f32 fc2 accumulator

    # Hidden tile must divide hidden exactly (so no garbage enters the fc2
    # contraction) and be a multiple of 128 (lane-dense), or be hidden itself.
    divisors = [hidden] + [t for t in range(128, hidden, 128) if hidden % t == 0]
    while True:
        fitting = [t for t in sorted(divisors, reverse=True)
                   if vmem_est(tm, t) <= _VMEM_BUDGET_BYTES]
        if fitting:
            return tm, fitting[0]
        if tm <= 128:
            return tm, min(divisors)                  # best effort
        tm = max(128, _round_up(tm // 2, 16))


def mlp_forward(x, params, *, tm=512, out_dtype=None):
    """x: (..., in_features) -> (..., out_features). Matches Mlp.forward (p=0)."""
    orig_shape = x.shape
    d_in = orig_shape[-1]
    w1, b1, w2, b2 = params["w1"], params["b1"], params["w2"], params["b2"]
    hidden, d_out = w1.shape[1], w2.shape[1]
    out_dtype = x.dtype if out_dtype is None else out_dtype

    # Fold all leading dims into one matmul M dimension (bitcast reshape).
    m = int(np.prod(orig_shape[:-1])) if len(orig_shape) > 1 else 1
    x2 = x.reshape(m, d_in)

    w1_bf = w1.astype(jnp.bfloat16)          # no-op when weights already stored bf16
    w2_bf = w2.astype(jnp.bfloat16)
    b1_2d = b1.reshape(1, hidden).astype(jnp.float32)
    b2_2d = b2.reshape(1, d_out).astype(jnp.float32)

    out_bytes = jnp.dtype(out_dtype).itemsize
    tm, th = _choose_tiles(m, d_in, hidden, d_out, out_bytes, tm)
    n_m = pl.cdiv(m, tm)                     # no jnp.pad: edge tiles are masked
    n_h = pl.cdiv(hidden, th)

    compiler_params = pltpu.CompilerParams(
        dimension_semantics=("parallel",) if n_h == 1 else ("parallel", "arbitrary"),
        vmem_limit_bytes=_VMEM_LIMIT_BYTES,
    )

    if n_h == 1:
        grid_spec = pltpu.PrefetchScalarGridSpec(
            num_scalar_prefetch=0,
            grid=(n_m,),
            in_specs=[
                pl.BlockSpec((tm, d_in), lambda i: (i, 0)),        # x (f32, M-tiled)
                pl.BlockSpec((d_in, hidden), lambda i: (0, 0)),    # W1 resident (bf16)
                pl.BlockSpec((1, hidden), lambda i: (0, 0)),       # b1
                pl.BlockSpec((hidden, d_out), lambda i: (0, 0)),   # W2 resident (bf16)
                pl.BlockSpec((1, d_out), lambda i: (0, 0)),        # b2
            ],
            out_specs=pl.BlockSpec((tm, d_out), lambda i: (i, 0)),
        )
        kernel = _mlp_kernel_fused
        scratch_msg = None  # (no scratch on the fused path)
        del scratch_msg
    else:
        grid_spec = pltpu.PrefetchScalarGridSpec(
            num_scalar_prefetch=0,
            grid=(n_m, n_h),
            in_specs=[
                pl.BlockSpec((tm, d_in), lambda i, j: (i, 0)),     # x
                pl.BlockSpec((d_in, th), lambda i, j: (0, j)),     # W1 column tile
                pl.BlockSpec((1, th), lambda i, j: (0, j)),        # b1 tile
                pl.BlockSpec((th, d_out), lambda i, j: (j, 0)),    # W2 row tile
                pl.BlockSpec((1, d_out), lambda i, j: (0, 0)),     # b2
            ],
            out_specs=pl.BlockSpec((tm, d_out), lambda i, j: (i, 0)),
            scratch_shapes=[pltpu.VMEM((tm, d_out), jnp.float32)],
        )
        kernel = _mlp_kernel_htiled

    out = pl.pallas_call(
        kernel,
        out_shape=jax.ShapeDtypeStruct((m, d_out), out_dtype),
        grid_spec=grid_spec,
        compiler_params=compiler_params,
    )(x2, w1_bf, b1_2d, w2_bf, b2_2d)

    return out.reshape(orig_shape[:-1] + (d_out,))


def make_params(key, in_features, hidden_features, out_features):
    """PyTorch-Linear-style init; weights pre-transposed to (in, out) and stored
    once in bf16 (MXU operand dtype); biases kept f32 for the epilogue."""
    k1, k2, k3, k4 = jax.random.split(key, 4)
    lim1 = 1.0 / math.sqrt(in_features)
    lim2 = 1.0 / math.sqrt(hidden_features)
    w1 = jax.random.uniform(k1, (in_features, hidden_features), jnp.float32, -lim1, lim1)
    b1 = jax.random.uniform(k2, (hidden_features,), jnp.float32, -lim1, lim1)
    w2 = jax.random.uniform(k3, (hidden_features, out_features), jnp.float32, -lim2, lim2)
    b2 = jax.random.uniform(k4, (out_features,), jnp.float32, -lim2, lim2)
    return dict(w1=w1.astype(jnp.bfloat16), b1=b1,
                w2=w2.astype(jnp.bfloat16), b2=b2)


def ref_forward(x, params):
    """Pure-JAX reference with the same bf16-operand / f32-accumulate recipe."""
    h = jnp.dot(x.astype(jnp.bfloat16), params["w1"].astype(jnp.bfloat16),
                preferred_element_type=jnp.float32)
    h = h + params["b1"].astype(jnp.float32)
    h = jnp.maximum(h, 0.3 * h)
    o = jnp.dot(h.astype(jnp.bfloat16), params["w2"].astype(jnp.bfloat16),
                preferred_element_type=jnp.float32)
    return o + params["b2"].astype(jnp.float32)


if __name__ == "__main__":
    B, S = 2, 128                 # leading dims folded into M = 256 (2 M tiles)
    IN, HID, OUT = 128, 256, 128  # lane-dense feature dims

    key = jax.random.PRNGKey(0)
    kx, kp = jax.random.split(key)
    x = jax.random.normal(kx, (B, S, IN), jnp.float32)
    params = make_params(kp, IN, HID, OUT)

    out = jax.block_until_ready(mlp_forward(x, params))
    ref = jax.block_until_ready(ref_forward(x, params))

    np.testing.assert_allclose(np.asarray(out), np.asarray(ref),
                               rtol=1e-2, atol=1e-2)
    print("KERNEL_OK")
</pallas_src>

<mosaic_0001>
module attributes {stable_mosaic.version = 11 : i64} {
  func.func @_mlp_kernel_fused(%arg0: i32, %arg1: memref<128x128xf32, #tpu.memory_space<vmem>>, %arg2: memref<128x256xbf16, #tpu.memory_space<vmem>>, %arg3: memref<1x256xf32, #tpu.memory_space<vmem>>, %arg4: memref<256x128xbf16, #tpu.memory_space<vmem>>, %arg5: memref<1x128xf32, #tpu.memory_space<vmem>>, %arg6: memref<128x128xf32, #tpu.memory_space<vmem>>) attributes {dimension_semantics = [#tpu.dimension_semantics<parallel>], iteration_bounds = array<i64: 2>, scalar_prefetch = 0 : i64, scratch_operands = 0 : i64, tpu.core_type = #tpu.core_type<tc>, window_params = [{transform_indices = @transform_0, window_bounds = array<i64: 128, 128>}, {pipeline_mode = #tpu.pipeline_mode<synchronous>, transform_indices = @transform_1, window_bounds = array<i64: 128, 256>}, {pipeline_mode = #tpu.pipeline_mode<synchronous>, transform_indices = @transform_2, window_bounds = array<i64: 1, 256>}, {pipeline_mode = #tpu.pipeline_mode<synchronous>, transform_indices = @transform_3, window_bounds = array<i64: 256, 128>}, {pipeline_mode = #tpu.pipeline_mode<synchronous>, transform_indices = @transform_4, window_bounds = array<i64: 1, 128>}, {transform_indices = @transform_5, window_bounds = array<i64: 128, 128>}]} {
    %c0 = arith.constant 0 : index
    %c0_0 = arith.constant 0 : index
    %0 = vector.load %arg1[%c0, %c0_0] : memref<128x128xf32, #tpu.memory_space<vmem>>, vector<128x128xf32>
    %1 = arith.truncf %0 : vector<128x128xf32> to vector<128x128xbf16>
    %c0_1 = arith.constant 0 : index
    %c0_2 = arith.constant 0 : index
    %2 = vector.load %arg2[%c0_1, %c0_2] : memref<128x256xbf16, #tpu.memory_space<vmem>>, vector<128x256xbf16>
    %cst = arith.constant dense<0.000000e+00> : vector<128x256xf32>
    %3 = tpu.matmul %1, %2, %cst {dimension_numbers = #tpu.dot_dimension_numbers<[1], [0], [0], [1], [0, 0, 1, 1], [], []>} : vector<128x128xbf16>, vector<128x256xbf16>, vector<128x256xf32> -> vector<128x256xf32>
    %c0_3 = arith.constant 0 : index
    %c0_4 = arith.constant 0 : index
    %4 = vector.load %arg3[%c0_3, %c0_4] : memref<1x256xf32, #tpu.memory_space<vmem>>, vector<1x256xf32>
    %5 = vector.broadcast %4 : vector<1x256xf32> to vector<128x256xf32>
    %6 = arith.addf %3, %5 : vector<128x256xf32>
    %cst_5 = arith.constant 3.000000e-01 : f32
    %7 = vector.broadcast %cst_5 : f32 to vector<128x256xf32>
    %8 = arith.mulf %7, %6 : vector<128x256xf32>
    %9 = arith.maximumf %6, %8 : vector<128x256xf32>
    %10 = arith.truncf %9 : vector<128x256xf32> to vector<128x256xbf16>
    %c0_6 = arith.constant 0 : index
    %c0_7 = arith.constant 0 : index
    %11 = vector.load %arg4[%c0_6, %c0_7] : memref<256x128xbf16, #tpu.memory_space<vmem>>, vector<256x128xbf16>
    %cst_8 = arith.constant dense<0.000000e+00> : vector<128x128xf32>
    %12 = tpu.matmul %10, %11, %cst_8 {dimension_numbers = #tpu.dot_dimension_numbers<[1], [0], [0], [1], [0, 0, 1, 1], [], []>} : vector<128x256xbf16>, vector<256x128xbf16>, vector<128x128xf32> -> vector<128x128xf32>
    %c0_9 = arith.constant 0 : index
    %c0_10 = arith.constant 0 : index
    %13 = vector.load %arg5[%c0_9, %c0_10] : memref<1x128xf32, #tpu.memory_space<vmem>>, vector<1x128xf32>
    %14 = vector.broadcast %13 : vector<1x128xf32> to vector<128x128xf32>
    %15 = arith.addf %12, %14 : vector<128x128xf32>
    %c0_11 = arith.constant 0 : index
    %c0_12 = arith.constant 0 : index
    %16 = vector.load %arg6[%c0_11, %c0_12] : memref<128x128xf32, #tpu.memory_space<vmem>>, vector<128x128xf32>
    tpu.vector_store %arg6[%c0_11, %c0_12], %15 {strides = array<i32>} : memref<128x128xf32, #tpu.memory_space<vmem>>, vector<128x128xf32>,
    return
  }
  func.func @transform_0(%arg0: i32) -> (i32, i32) {
    %c0_i32 = arith.constant 0 : i32
    %c0_i32_0 = arith.constant 0 : i32
    return %arg0, %c0_i32 : i32, i32
  }
  func.func @transform_1(%arg0: i32) -> (i32, i32) {
    %c0_i32 = arith.constant 0 : i32
    %c0_i32_0 = arith.constant 0 : i32
    %c0_i32_1 = arith.constant 0 : i32
    return %c0_i32, %c0_i32_0 : i32, i32
  }
  func.func @transform_2(%arg0: i32) -> (i32, i32) {
    %c0_i32 = arith.constant 0 : i32
    %c0_i32_0 = arith.constant 0 : i32
    %c0_i32_1 = arith.constant 0 : i32
    return %c0_i32, %c0_i32_0 : i32, i32
  }
  func.func @transform_3(%arg0: i32) -> (i32, i32) {
    %c0_i32 = arith.constant 0 : i32
    %c0_i32_0 = arith.constant 0 : i32
    %c0_i32_1 = arith.constant 0 : i32
    return %c0_i32, %c0_i32_0 : i32, i32
  }
  func.func @transform_4(%arg0: i32) -> (i32, i32) {
    %c0_i32 = arith.constant 0 : i32
    %c0_i32_0 = arith.constant 0 : i32
    %c0_i32_1 = arith.constant 0 : i32
    return %c0_i32, %c0_i32_0 : i32, i32
  }
  func.func @transform_5(%arg0: i32) -> (i32, i32) {
    %c0_i32 = arith.constant 0 : i32
    %c0_i32_0 = arith.constant 0 : i32
    return %arg0, %c0_i32 : i32, i32
  }
}

</mosaic_0001>

<llo_original>
// kernel: tpu_custom_call.1
$region0: #{tpu_custom_call.1}
  #allocation0 [shape = 'u32[]', space=smem, size = 0x4, offset = 0x4, fixed_abs, tag = 'smem constant byte address 0x4 - core index']
  #allocation1 [shape = 'u32[72,128]{1,0:T(1,128)}', space=vmem, size = 0x9000, scoped, tag = 'internal scratch']
  %s0 = inlined_call_operand.hbm [shape: f32[256,128], index: 0, kind: input, shape index: {}]
  %s1 = inlined_call_operand.hbm [shape: bf16[128,256], index: 1, kind: input, shape index: {}]
  %s2 = inlined_call_operand.hbm [shape: f32[1,256], index: 2, kind: input, shape index: {}]
  %s3 = inlined_call_operand.hbm [shape: bf16[256,128], index: 3, kind: input, shape index: {}]
  %s4 = inlined_call_operand.vmem [shape: f32[1,128], index: 4, kind: input, shape index: {}]
  %s5 = inlined_call_operand.hbm [shape: f32[256,128], index: 5, kind: output, shape index: {}]
  %s6 = sld [smem:[#allocation0]]
  $region69: #{tpu_custom_call.1} parent=0
    _
  %s8 = ssub.s32 1, %s6
  %s9 = scalar_select 0, %s8, %s6
  $region1: #{tpu_custom_call.1} parent=0
    #allocation2 [shape = 'u8[131072]{0}', space=vmem, size = 0x20000, scoped, tag = 'input window, operand 0']
    #allocation3 [shape = 's32[2]{0}', space=sflag, size = 0x8, scoped, tag = 'scoped memory for tpu_custom_call.1']
    #allocation4 [shape = 's32[2]{0}', space=sflag, size = 0x8, scoped, tag = 'scoped memory for tpu_custom_call.1']
    #allocation5 [shape = 'u8[65536]{0}', space=vmem, size = 0x10000, scoped, tag = 'input window, operand 1, single buffered']
    #allocation6 [shape = 's32[1]{0}', space=sflag, size = 0x4, scoped, tag = 'scoped memory for tpu_custom_call.1']
    #allocation7 [shape = 'u8[1024]{0}', space=vmem, size = 0x400, scoped, tag = 'input window, operand 2, single buffered']
    #allocation8 [shape = 'u8[65536]{0}', space=vmem, size = 0x10000, scoped, tag = 'input window, operand 3, single buffered']
    #allocation9 [shape = 's32[1]{0}', space=sflag, size = 0x4, scoped, tag = 'scoped memory for tpu_custom_call.1']
    #allocation10 [shape = 'u8[131072]{0}', space=vmem, size = 0x20000, scoped, tag = 'output window, operand 0']
    %10 = vsyncpa [#allocation3], 0
    %s11 = scalar_lea.sflag [#allocation3], 1
    %12 = vsyncpa %s11, 0
    %13 = vsyncpa [#allocation6], 0
    %14 = vsyncpa [#allocation9], 0
    %15 = vsyncpa [#allocation4], 0
    %s16 = scalar_lea.sflag [#allocation4], 1
    %17 = vsyncpa %s16, 0
    loop: start=0, step=1, limit=4
    $region2: #{tpu_custom_call.1} parent=1 // loop_pre_header
      _
    $region3: #{tpu_custom_call.1} parent=1 // loop_header
      %s19 = sphi 0, %s23
      %p20 = scmp.ge.s32.totalorder %s19, 4
      %s29 = sphi 0, %s31
      %s32 = sphi 0, %s29
      %s33 = sphi 0, %s32
      %s49 = sphi 0, %s33
      %s53 = sphi 0, %s53
      %s55 = sphi 0, %s53
      %s56 = sphi 0, %s55
      %s70 = sphi 0, %s56
      %s74 = sphi 0, %s74
      %s76 = sphi 0, %s74
      %s77 = sphi 0, %s76
      %s91 = sphi 0, %s77
      %s95 = sphi 0, %s95
      %s97 = sphi 0, %s95
      %s98 = sphi 0, %s97
      %s112 = sphi 0, %s98
      %s116 = sphi 0, %s116
      %s118 = sphi 0, %s116
      %s119 = sphi 0, %s118
      %s133 = sphi 0, %s119
      %s139 = sphi 0, %s141
      %s142 = sphi 0, %s139
      %s143 = sphi 0, %s142
      %s159 = sphi 0, %s143
    $region4: #{tpu_custom_call.1} parent=1 // loop_header_branch
      %22 = sbr.rel (%p20) target = $region8
    $region5: #{tpu_custom_call.1} parent=1 // loop_body
      %s24 = ssub.s32 %s19, 1
      %s25 = ssub.s32 %s19, 2
      %s26 = sadd.s32 %s19, 1
      %s27 = ssub.s32 %s19, %s26
      %p28 = scmp.eq.s32.totalorder %s27, 0
      %s30 = sadd.s32 %s29, 1
      %s31 = scalar_select %p28, %s29, %s30
      %p34 = pneg %p28
      %p35 = scmp.eq.s32.totalorder %s19, 1
      %p36 = por %p34, %p35
      %p37 = scmp.ne.s32.totalorder %s29, %s32
      %p38 = scmp.eq.s32.totalorder %s19, 0
      %p39 = por %p37, %p38
      %p40 = scmp.ne.s32.totalorder %s29, %s32
      %p41 = scmp.eq.s32.totalorder %s24, 1
      %p42 = por %p40, %p41
      %p43 = scmp.ne.s32.totalorder %s32, %s33
      %p44 = scmp.eq.s32.totalorder %s24, 0
      %p45 = por %p43, %p44
      %p46 = scmp.ne.s32.totalorder %s32, %s33
      %p47 = scmp.eq.s32.totalorder %s25, 1
      %p48 = por %p46, %p47
      %p50 = scmp.ne.s32.totalorder %s33, %s49
      %p51 = scmp.eq.s32.totalorder %s25, 0
      %p52 = por %p50, %p51
      %s54 = sadd.s32 %s53, 1
      %p57 = scmp.eq.s32.totalorder %s19, 1
      %p58 = scmp.ne.s32.totalorder %s53, %s55
      %p59 = scmp.eq.s32.totalorder %s19, 0
      %p60 = por %p58, %p59
      %p61 = scmp.ne.s32.totalorder %s53, %s55
      %p62 = scmp.eq.s32.totalorder %s24, 1
      %p63 = por %p61, %p62
      %p64 = scmp.ne.s32.totalorder %s55, %s56
      %p65 = scmp.eq.s32.totalorder %s24, 0
      %p66 = por %p64, %p65
      %p67 = scmp.ne.s32.totalorder %s55, %s56
      %p68 = scmp.eq.s32.totalorder %s25, 1
      %p69 = por %p67, %p68
      %p71 = scmp.ne.s32.totalorder %s56, %s70
      %p72 = scmp.eq.s32.totalorder %s25, 0
      %p73 = por %p71, %p72
      %s75 = sadd.s32 %s74, 1
      %p78 = scmp.eq.s32.totalorder %s19, 1
      %p79 = scmp.ne.s32.totalorder %s74, %s76
      %p80 = scmp.eq.s32.totalorder %s19, 0
      %p81 = por %p79, %p80
      %p82 = scmp.ne.s32.totalorder %s74, %s76
      %p83 = scmp.eq.s32.totalorder %s24, 1
      %p84 = por %p82, %p83
      %p85 = scmp.ne.s32.totalorder %s76, %s77
      %p86 = scmp.eq.s32.totalorder %s24, 0
      %p87 = por %p85, %p86
      %p88 = scmp.ne.s32.totalorder %s76, %s77
      %p89 = scmp.eq.s32.totalorder %s25, 1
      %p90 = por %p88, %p89
      %p92 = scmp.ne.s32.totalorder %s77, %s91
      %p93 = scmp.eq.s32.totalorder %s25, 0
      %p94 = por %p92, %p93
      %s96 = sadd.s32 %s95, 1
      %p99 = scmp.eq.s32.totalorder %s19, 1
      %p100 = scmp.ne.s32.totalorder %s95, %s97
      %p101 = scmp.eq.s32.totalorder %s19, 0
      %p102 = por %p100, %p101
      %p103 = scmp.ne.s32.totalorder %s95, %s97
      %p104 = scmp.eq.s32.totalorder %s24, 1
      %p105 = por %p103, %p104
      %p106 = scmp.ne.s32.totalorder %s97, %s98
      %p107 = scmp.eq.s32.totalorder %s24, 0
      %p108 = por %p106, %p107
      %p109 = scmp.ne.s32.totalorder %s97, %s98
      %p110 = scmp.eq.s32.totalorder %s25, 1
      %p111 = por %p109, %p110
      %p113 = scmp.ne.s32.totalorder %s98, %s112
      %p114 = scmp.eq.s32.totalorder %s25, 0
      %p115 = por %p113, %p114
      %s117 = sadd.s32 %s116, 1
      %p120 = scmp.eq.s32.totalorder %s19, 1
      %p121 = scmp.ne.s32.totalorder %s116, %s118
      %p122 = scmp.eq.s32.totalorder %s19, 0
      %p123 = por %p121, %p122
      %p124 = scmp.ne.s32.totalorder %s116, %s118
      %p125 = scmp.eq.s32.totalorder %s24, 1
      %p126 = por %p124, %p125
      %p127 = scmp.ne.s32.totalorder %s118, %s119
      %p128 = scmp.eq.s32.totalorder %s24, 0
      %p129 = por %p127, %p128
      %p130 = scmp.ne.s32.totalorder %s118, %s119
      %p131 = scmp.eq.s32.totalorder %s25, 1
      %p132 = por %p130, %p131
      %p134 = scmp.ne.s32.totalorder %s119, %s133
      %p135 = scmp.eq.s32.totalorder %s25, 0
      %p136 = por %p134, %p135
      %s137 = ssub.s32 %s19, %s26
      %p138 = scmp.eq.s32.totalorder %s137, 0
      %s140 = sadd.s32 %s139, 1
      %s141 = scalar_select %p138, %s139, %s140
      %p144 = pneg %p138
      %p145 = scmp.eq.s32.totalorder %s19, 1
      %p146 = por %p144, %p145
      %p147 = scmp.ne.s32.totalorder %s139, %s142
      %p148 = scmp.eq.s32.totalorder %s19, 0
      %p149 = por %p147, %p148
      %p150 = scmp.ne.s32.totalorder %s139, %s142
      %p151 = scmp.eq.s32.totalorder %s24, 1
      %p152 = por %p150, %p151
      %p153 = scmp.ne.s32.totalorder %s142, %s143
      %p154 = scmp.eq.s32.totalorder %s24, 0
      %p155 = por %p153, %p154
      %p156 = scmp.ne.s32.totalorder %s142, %s143
      %p157 = scmp.eq.s32.totalorder %s25, 1
      %p158 = por %p156, %p157
      %p160 = scmp.ne.s32.totalorder %s143, %s159
      %p161 = scmp.eq.s32.totalorder %s25, 0
      %p162 = por %p160, %p161
      %p163 = scmp.le.s32.totalorder 1, %s19
      %p164 = scmp.lt.s32.totalorder %s19, 3
      %p165 = pnand %p163, %p164
      %p166 = pneg %p165
      // Predicated region
      $region9: #{tpu_custom_call.1} parent=5 // pred_check
        _
      $region10: #{tpu_custom_call.1} parent=5 // pred_check_branch
        %168 = sbr.rel (%p165) target = $region12
      $region11: #{tpu_custom_call.1} parent=5 // pred_region
        %s169 = ssub.s32 %s19, 1
        // Predicated region
        $region13: #{tpu_custom_call.1} parent=11 // pred_check
          %p170 = pneg %p66
        $region14: #{tpu_custom_call.1} parent=11 // pred_check_branch
          %172 = sbr.rel (%p170) target = $region16
        $region15: #{tpu_custom_call.1} parent=11 // pred_region
          %174 = vsyncadd [#allocation6], 0
          %s175 = sshll.u32 %s1, 4
          %s176 = int_to_ptr.hbm [resolvable:$true] %s175
          %s177 = sshll.u32 [#allocation5], 4
          %s178 = int_to_ptr.vmem [resolvable:$true] %s177
          %183 = dma.hbm_to_vmem [thread:$0]  %s176, 2048, %s178, [#allocation6], 128, 128, 8
        $region16: #{tpu_custom_call.1} parent=11 // pred_fallthru
          _
        // Predicated region
        $region17: #{tpu_custom_call.1} parent=11 // pred_check
          %p184 = pneg %p87
        $region18: #{tpu_custom_call.1} parent=11 // pred_check_branch
          %186 = sbr.rel (%p184) target = $region20
        $region19: #{tpu_custom_call.1} parent=11 // pred_region
          %188 = vsyncadd [#allocation6], 0
          %s190 = sshll.u32 %s2, 4
          %s191 = int_to_ptr.hbm [resolvable:$true] %s190
          %s192 = sshll.u32 [#allocation7], 4
          %s193 = int_to_ptr.vmem [resolvable:$true] %s192
          %195 = dma.hbm_to_vmem [thread:$0]  %s191, 32, %s193, [#allocation6]
        $region20: #{tpu_custom_call.1} parent=11 // pred_fallthru
          _
        // Predicated region
        $region21: #{tpu_custom_call.1} parent=11 // pred_check
          %p196 = pneg %p108
        $region22: #{tpu_custom_call.1} parent=11 // pred_check_branch
          %198 = sbr.rel (%p196) target = $region24
        $region23: #{tpu_custom_call.1} parent=11 // pred_region
          %200 = vsyncadd [#allocation9], 0
          %s201 = sshll.u32 %s3, 4
          %s202 = int_to_ptr.hbm [resolvable:$true] %s201
          %s203 = sshll.u32 [#allocation8], 4
          %s204 = int_to_ptr.vmem [resolvable:$true] %s203
          %209 = dma.hbm_to_vmem [thread:$0]  %s202, 2048, %s204, [#allocation9], 64, 64, 4
        $region24: #{tpu_custom_call.1} parent=11 // pred_fallthru
          _
        // Predicated region
        $region25: #{tpu_custom_call.1} parent=11 // pred_check
          %p210 = pneg %p129
        $region26: #{tpu_custom_call.1} parent=11 // pred_check_branch
          %212 = sbr.rel (%p210) target = $region28
        $region27: #{tpu_custom_call.1} parent=11 // pred_region
          _
        $region28: #{tpu_custom_call.1} parent=11 // pred_fallthru
          _
      $region12: #{tpu_custom_call.1} parent=5 // pred_fallthru
        _
      %p213 = scmp.lt.s32.totalorder %s19, 2
      // Predicated region
      $region29: #{tpu_custom_call.1} parent=5 // pred_check
        %p214 = pneg %p213
      $region30: #{tpu_custom_call.1} parent=5 // pred_check_branch
        %216 = sbr.rel (%p214) target = $region32
      $region31: #{tpu_custom_call.1} parent=5 // pred_region
        // Predicated region
        $region33: #{tpu_custom_call.1} parent=31 // pred_check
          %p217 = pneg %p39
        $region34: #{tpu_custom_call.1} parent=31 // pred_check_branch
          %219 = sbr.rel (%p217) target = $region36
        $region35: #{tpu_custom_call.1} parent=31 // pred_region
          %s220 = sand.u32 %s29, 1
          %s221 = scalar_lea.sflag [#allocation3], %s220
          %s222 = sand.u32 %s29, 1
          %s223 = smul.addr %s222, 128
          %s224 = scalar_lea.vmem [#allocation2], %s223
          %s225 = smul.u32 16, %s19
          %227 = vsyncadd %s221, 0
          %s228 = smul.addr %s225, 8
          %s229 = scalar_lea.hbm %s0, %s228
          %s230 = sshll.u32 %s229, 4
          %s231 = int_to_ptr.hbm [resolvable:$true] %s230
          %s232 = sshll.u32 %s224, 4
          %s233 = int_to_ptr.vmem [resolvable:$true] %s232
          %238 = dma.hbm_to_vmem [thread:$0]  %s231, 2048, %s233, %s221, 128, 128, 8
        $region36: #{tpu_custom_call.1} parent=31 // pred_fallthru
          _
      $region32: #{tpu_custom_call.1} parent=5 // pred_fallthru
        _
      %p239 = scmp.le.s32.totalorder 1, %s19
      %p240 = scmp.lt.s32.totalorder %s19, 3
      %p241 = pnand %p239, %p240
      %p242 = pneg %p241
      // Predicated region
      $region37: #{tpu_custom_call.1} parent=5 // pred_check
        _
      $region38: #{tpu_custom_call.1} parent=5 // pred_check_branch
        %244 = sbr.rel (%p241) target = $region40
      $region39: #{tpu_custom_call.1} parent=5 // pred_region
        %s245 = ssub.s32 %s19, 1
        %s246 = sand.u32 %s32, 1
        %s247 = scalar_lea.sflag [#allocation3], %s246
        %s248 = sand.u32 %s32, 1
        %s249 = smul.addr %s248, 128
        %s250 = scalar_lea.vmem [#allocation2], %s249
        // Predicated region
        $region41: #{tpu_custom_call.1} parent=39 // pred_check
          %p251 = pneg %p45
        $region42: #{tpu_custom_call.1} parent=39 // pred_check_branch
          %253 = sbr.rel (%p251) target = $region44
        $region43: #{tpu_custom_call.1} parent=39 // pred_region
          %255 = dma.done %s247, 2048
        $region44: #{tpu_custom_call.1} parent=39 // pred_fallthru
          _
        // Predicated region
        $region45: #{tpu_custom_call.1} parent=39 // pred_check
          %p256 = pneg %p66
        $region46: #{tpu_custom_call.1} parent=39 // pred_check_branch
          %258 = sbr.rel (%p256) target = $region48
        $region47: #{tpu_custom_call.1} parent=39 // pred_region
          %260 = dma.done [#allocation6], 2048
        $region48: #{tpu_custom_call.1} parent=39 // pred_fallthru
          _
        // Predicated region
        $region49: #{tpu_custom_call.1} parent=39 // pred_check
          %p261 = pneg %p87
        $region50: #{tpu_custom_call.1} parent=39 // pred_check_branch
          %263 = sbr.rel (%p261) target = $region52
        $region51: #{tpu_custom_call.1} parent=39 // pred_region
          %265 = dma.done [#allocation6], 32
        $region52: #{tpu_custom_call.1} parent=39 // pred_fallthru
          _
        // Predicated region
        $region53: #{tpu_custom_call.1} parent=39 // pred_check
          %p266 = pneg %p108
        $region54: #{tpu_custom_call.1} parent=39 // pred_check_branch
          %268 = sbr.rel (%p266) target = $region56
        $region55: #{tpu_custom_call.1} parent=39 // pred_region
          %270 = dma.done [#allocation9], 2048
        $region56: #{tpu_custom_call.1} parent=39 // pred_fallthru
          _
        %s271 = sand.u32 %s32, 1
        %s272 = scalar_lea.sflag [#allocation3], %s271
        %s273 = sand.u32 %s32, 1
        %s274 = smul.addr %s273, 128
        %s275 = scalar_lea.vmem [#allocation2], %s274
        %p276 = pneg %p45
        %p277 = pneg %p42
        %p278 = pneg %p66
        %p279 = pneg %p63
        %p280 = pneg %p87
        %p281 = pneg %p84
        %p282 = pneg %p108
        %p283 = pneg %p105
        %p284 = pneg %p129
        %p285 = pneg %p126
        %p286 = pneg %p155
        %p287 = pneg %p152
        %s288 = sand.u32 %s142, 1
        %s289 = scalar_lea.sflag [#allocation4], %s288
        %s290 = sand.u32 %s142, 1
        %s291 = smul.addr %s290, 128
        %s292 = scalar_lea.vmem [#allocation10], %s291
        %s293 = smul.u32 16, %s24
        %s294 = smul.u32 16, %s24
        %v295 = vld [vmem:[%s250] sm:$0xff]
        %v296 = vld [vmem:[%s250 + $0x8] sm:$0xff]
        %v297 = vld [vmem:[%s250 + $0x10] sm:$0xff]
        %v298 = vld [vmem:[%s250 + $0x18] sm:$0xff]
        %v299 = vld [vmem:[%s250 + $0x20] sm:$0xff]
        %v300 = vld [vmem:[%s250 + $0x28] sm:$0xff]
        %v301 = vld [vmem:[%s250 + $0x30] sm:$0xff]
        %v302 = vld [vmem:[%s250 + $0x38] sm:$0xff]
        %v303 = vld [vmem:[%s250 + $0x40] sm:$0xff]
        %v304 = vld [vmem:[%s250 + $0x48] sm:$0xff]
        %v305 = vld [vmem:[%s250 + $0x50] sm:$0xff]
        %v306 = vld [vmem:[%s250 + $0x58] sm:$0xff]
        %v307 = vld [vmem:[%s250 + $0x60] sm:$0xff]
        %v308 = vld [vmem:[%s250 + $0x68] sm:$0xff]
        %v309 = vld [vmem:[%s250 + $0x70] sm:$0xff]
        %v310 = vld [vmem:[%s250 + $0x78] sm:$0xff]
        %v311 = vpack.c.bf16 %v296, %v295
        %v312 = vpack.c.bf16 %v298, %v297
        %v313 = vpack.c.bf16 %v300, %v299
        %v314 = vpack.c.bf16 %v302, %v301
        %v315 = vpack.c.bf16 %v304, %v303
        %v316 = vpack.c.bf16 %v306, %v305
        %v317 = vpack.c.bf16 %v308, %v307
        %v318 = vpack.c.bf16 %v310, %v309
        %v319 = vld [vmem:[#allocation5] sm:$0xff]
        %v320 = vld [vmem:[#allocation5 + $0x8] sm:$0xff]
        %v321 = vld [vmem:[#allocation5 + $0x10] sm:$0xff]
        %v322 = vld [vmem:[#allocation5 + $0x18] sm:$0xff]
        %v323 = vld [vmem:[#allocation5 + $0x20] sm:$0xff]
        %v324 = vld [vmem:[#allocation5 + $0x28] sm:$0xff]
        %v325 = vld [vmem:[#allocation5 + $0x30] sm:$0xff]
        %v326 = vld [vmem:[#allocation5 + $0x38] sm:$0xff]
        %v327 = vld [vmem:[#allocation5 + $0x40] sm:$0xff]
        %v328 = vld [vmem:[#allocation5 + $0x48] sm:$0xff]
        %v329 = vld [vmem:[#allocation5 + $0x50] sm:$0xff]
        %v330 = vld [vmem:[#allocation5 + $0x58] sm:$0xff]
        %v331 = vld [vmem:[#allocation5 + $0x60] sm:$0xff]
        %v332 = vld [vmem:[#allocation5 + $0x68] sm:$0xff]
        %v333 = vld [vmem:[#allocation5 + $0x70] sm:$0xff]
        %v334 = vld [vmem:[#allocation5 + $0x78] sm:$0xff]
        %v335 = vld [vmem:[#allocation7] sm:$0x3]
        %v337 = vperm.slane %v335, 0
        %v338 = vperm.slane %v335, 1
        %v357 = vunpack.c.l.b16 %v319
        %v358 = vunpack.c.h.b16 %v319
        %v359 = vunpack.c.l.b16 %v320
        %v360 = vunpack.c.h.b16 %v320
        %v361 = vunpack.c.l.b16 %v321
        %v362 = vunpack.c.h.b16 %v321
        %v363 = vunpack.c.l.b16 %v322
        %v364 = vunpack.c.h.b16 %v322
        %v365 = vunpack.c.l.b16 %v323
        %v366 = vunpack.c.h.b16 %v323
        %v367 = vunpack.c.l.b16 %v324
        %v368 = vunpack.c.h.b16 %v324
        %v369 = vunpack.c.l.b16 %v325
        %v370 = vunpack.c.h.b16 %v325
        %v371 = vunpack.c.l.b16 %v326
        %v372 = vunpack.c.h.b16 %v326
        %v373 = vunpack.c.l.b16 %v327
        %v374 = vunpack.c.h.b16 %v327
        %v375 = vunpack.c.l.b16 %v328
        %v376 = vunpack.c.h.b16 %v328
        %v377 = vunpack.c.l.b16 %v329
        %v378 = vunpack.c.h.b16 %v329
        %v379 = vunpack.c.l.b16 %v330
        %v380 = vunpack.c.h.b16 %v330
        %v381 = vunpack.c.l.b16 %v331
        %v382 = vunpack.c.h.b16 %v331
        %v383 = vunpack.c.l.b16 %v332
        %v384 = vunpack.c.h.b16 %v332
        %v385 = vunpack.c.l.b16 %v333
        %v386 = vunpack.c.h.b16 %v333
        %v387 = vunpack.c.l.b16 %v334
        %v388 = vunpack.c.h.b16 %v334
        %v389 = vpack.c.b16 %v359, %v357
        %v390 = vpack.c.b16 %v360, %v358
        %v391 = vpack.c.b16 %v363, %v361
        %v392 = vpack.c.b16 %v364, %v362
        %v393 = vpack.c.b16 %v367, %v365
        %v394 = vpack.c.b16 %v368, %v366
        %v395 = vpack.c.b16 %v371, %v369
        %v396 = vpack.c.b16 %v372, %v370
        %v397 = vpack.c.b16 %v375, %v373
        %v398 = vpack.c.b16 %v376, %v374
        %v399 = vpack.c.b16 %v379, %v377
        %v400 = vpack.c.b16 %v380, %v378
        %v401 = vpack.c.b16 %v383, %v381
        %v402 = vpack.c.b16 %v384, %v382
        %v403 = vpack.c.b16 %v387, %v385
        %v404 = vpack.c.b16 %v388, %v386
        %421 = vmatpush.bf16.msra.mxu0 %v403
        %422 = vmatpush.bf16.msra.mxu0 %v401
        %423 = vmatpush.bf16.msra.mxu0 %v399
        %424 = vmatpush.bf16.msra.mxu0 %v397
        %425 = vmatpush.bf16.msra.mxu0 %v395
        %426 = vmatpush.bf16.msra.mxu0 %v393
        %427 = vmatpush.bf16.msra.mxu0 %v391
        %428 = vmatpush.bf16.msra.mxu0 %v389
        %429 = vmatmul.bf16.gmra.mxu0 %v311
        %v430 = vpop.f32.mrf.mxu0
        %v431 = vadd.f32 %v337, %v430
        %v432 = vpop.f32.mrf.mxu0
        %v433 = vadd.f32 %v337, %v432
        %434 = vmatmul.bf16.gmra.mxu0 %v312
        %v435 = vpop.f32.mrf.mxu0
        %v436 = vadd.f32 %v337, %v435
        %v437 = vpop.f32.mrf.mxu0
        %v438 = vadd.f32 %v337, %v437
        %439 = vmatmul.bf16.gmra.mxu0 %v313
        %v440 = vpop.f32.mrf.mxu0
        %v441 = vadd.f32 %v337, %v440
        %v442 = vpop.f32.mrf.mxu0
        %v443 = vadd.f32 %v337, %v442
        %444 = vmatmul.bf16.gmra.mxu0 %v314
        %v445 = vpop.f32.mrf.mxu0
        %v446 = vadd.f32 %v337, %v445
        %v447 = vpop.f32.mrf.mxu0
        %v448 = vadd.f32 %v337, %v447
        %449 = vmatmul.bf16.gmra.mxu0 %v315
        %v450 = vpop.f32.mrf.mxu0
        %v451 = vadd.f32 %v337, %v450
        %v452 = vpop.f32.mrf.mxu0
        %v453 = vadd.f32 %v337, %v452
        %454 = vmatmul.bf16.gmra.mxu0 %v316
        %v455 = vpop.f32.mrf.mxu0
        %v456 = vadd.f32 %v337, %v455
        %v457 = vpop.f32.mrf.mxu0
        %v458 = vadd.f32 %v337, %v457
        %459 = vmatmul.bf16.gmra.mxu0 %v317
        %v460 = vpop.f32.mrf.mxu0
        %v461 = vadd.f32 %v337, %v460
        %v462 = vpop.f32.mrf.mxu0
        %v463 = vadd.f32 %v337, %v462
        %464 = vmatmul.bf16.gmra.mxu0 %v318
        %v465 = vpop.f32.mrf.mxu0
        %v466 = vadd.f32 %v337, %v465
        %v467 = vpop.f32.mrf.mxu0
        %v468 = vadd.f32 %v337, %v467
        %469 = vdwg.mxu0
        %470 = vmatpush.bf16.msra.mxu0 %v404
        %471 = vmatpush.bf16.msra.mxu0 %v402
        %472 = vmatpush.bf16.msra.mxu0 %v400
        %473 = vmatpush.bf16.msra.mxu0 %v398
        %474 = vmatpush.bf16.msra.mxu0 %v396
        %475 = vmatpush.bf16.msra.mxu0 %v394
        %476 = vmatpush.bf16.msra.mxu0 %v392
        %477 = vmatpush.bf16.msra.mxu0 %v390
        %478 = vmatmul.bf16.gmra.mxu0 %v311
        %v479 = vpop.f32.mrf.mxu0
        %v480 = vadd.f32 %v338, %v479
        %v481 = vpop.f32.mrf.mxu0
        %v482 = vadd.f32 %v338, %v481
        %483 = vmatmul.bf16.gmra.mxu0 %v312
        %v484 = vpop.f32.mrf.mxu0
        %v485 = vadd.f32 %v338, %v484
        %v486 = vpop.f32.mrf.mxu0
        %v487 = vadd.f32 %v338, %v486
        %488 = vmatmul.bf16.gmra.mxu0 %v313
        %v489 = vpop.f32.mrf.mxu0
        %v490 = vadd.f32 %v338, %v489
        %v491 = vpop.f32.mrf.mxu0
        %v492 = vadd.f32 %v338, %v491
        %493 = vmatmul.bf16.gmra.mxu0 %v314
        %v494 = vpop.f32.mrf.mxu0
        %v495 = vadd.f32 %v338, %v494
        %v496 = vpop.f32.mrf.mxu0
        %v497 = vadd.f32 %v338, %v496
        %498 = vmatmul.bf16.gmra.mxu0 %v315
        %v499 = vpop.f32.mrf.mxu0
        %v500 = vadd.f32 %v338, %v499
        %v501 = vpop.f32.mrf.mxu0
        %v502 = vadd.f32 %v338, %v501
        %503 = vmatmul.bf16.gmra.mxu0 %v316
        %v504 = vpop.f32.mrf.mxu0
        %v505 = vadd.f32 %v338, %v504
        %v506 = vpop.f32.mrf.mxu0
        %v507 = vadd.f32 %v338, %v506
        %508 = vmatmul.bf16.gmra.mxu0 %v317
        %v509 = vpop.f32.mrf.mxu0
        %v510 = vadd.f32 %v338, %v509
        %v511 = vpop.f32.mrf.mxu0
        %v512 = vadd.f32 %v338, %v511
        %513 = vmatmul.bf16.gmra.mxu0 %v318
        %v514 = vpop.f32.mrf.mxu0
        %v515 = vadd.f32 %v338, %v514
        %v516 = vpop.f32.mrf.mxu0
        %v517 = vadd.f32 %v338, %v516
        %518 = vdwg.mxu0
        %v519 = vmul.f32 %v431, 0.3
        %v520 = vmul.f32 %v480, 0.3
        %v521 = vmul.f32 %v433, 0.3
        %v522 = vmul.f32 %v482, 0.3
        %v523 = vmul.f32 %v436, 0.3
        %v524 = vmul.f32 %v485, 0.3
        %v525 = vmul.f32 %v438, 0.3
        %v526 = vmul.f32 %v487, 0.3
        %v527 = vmul.f32 %v441, 0.3
        %v528 = vmul.f32 %v490, 0.3
        %v529 = vmul.f32 %v443, 0.3
        %v530 = vmul.f32 %v492, 0.3
        %v531 = vmul.f32 %v446, 0.3
        %v532 = vmul.f32 %v495, 0.3
        %v533 = vmul.f32 %v448, 0.3
        %v534 = vmul.f32 %v497, 0.3
        %v535 = vmul.f32 %v451, 0.3
        %v536 = vmul.f32 %v500, 0.3
        %v537 = vmul.f32 %v453, 0.3
        %v538 = vmul.f32 %v502, 0.3
        %v539 = vmul.f32 %v456, 0.3
        %v540 = vmul.f32 %v505, 0.3
        %v541 = vmul.f32 %v458, 0.3
        %v542 = vmul.f32 %v507, 0.3
        %v543 = vmul.f32 %v461, 0.3
        %v544 = vmul.f32 %v510, 0.3
        %v545 = vmul.f32 %v463, 0.3
        %v546 = vmul.f32 %v512, 0.3
        %v547 = vmul.f32 %v466, 0.3
        %v548 = vmul.f32 %v515, 0.3
        %v549 = vmul.f32 %v468, 0.3
        %v550 = vmul.f32 %v517, 0.3
        %v551 = vmax.f32 %v431, %v519
        %v552 = vmax.f32 %v480, %v520
        %v553 = vmax.f32 %v433, %v521
        %v554 = vmax.f32 %v482, %v522
        %v555 = vmax.f32 %v436, %v523
        %v556 = vmax.f32 %v485, %v524
        %v557 = vmax.f32 %v438, %v525
        %v558 = vmax.f32 %v487, %v526
        %v559 = vmax.f32 %v441, %v527
        %v560 = vmax.f32 %v490, %v528
        %v561 = vmax.f32 %v443, %v529
        %v562 = vmax.f32 %v492, %v530
        %v563 = vmax.f32 %v446, %v531
        %v564 = vmax.f32 %v495, %v532
        %v565 = vmax.f32 %v448, %v533
        %v566 = vmax.f32 %v497, %v534
        %v567 = vmax.f32 %v451, %v535
        %v568 = vmax.f32 %v500, %v536
        %v569 = vmax.f32 %v453, %v537
        %v570 = vmax.f32 %v502, %v538
        %v571 = vmax.f32 %v456, %v539
        %v572 = vmax.f32 %v505, %v540
        %v573 = vmax.f32 %v458, %v541
        %v574 = vmax.f32 %v507, %v542
        %v575 = vmax.f32 %v461, %v543
        %v576 = vmax.f32 %v510, %v544
        %v577 = vmax.f32 %v463, %v545
        %v578 = vmax.f32 %v512, %v546
        %v579 = vmax.f32 %v466, %v547
        %v580 = vmax.f32 %v515, %v548
        %v581 = vmax.f32 %v468, %v549
        %v582 = vmax.f32 %v517, %v550
        %v583 = vpack.c.bf16 %v553, %v551
        %v584 = vpack.c.bf16 %v554, %v552
        %v585 = vpack.c.bf16 %v557, %v555
        %v586 = vpack.c.bf16 %v558, %v556
        %v587 = vpack.c.bf16 %v561, %v559
        %v588 = vpack.c.bf16 %v562, %v560
        %v589 = vpack.c.bf16 %v565, %v563
        %v590 = vpack.c.bf16 %v566, %v564
        %v591 = vpack.c.bf16 %v569, %v567
        %v592 = vpack.c.bf16 %v570, %v568
        %v593 = vpack.c.bf16 %v573, %v571
        %v594 = vpack.c.bf16 %v574, %v572
        %v595 = vpack.c.bf16 %v577, %v575
        %v596 = vpack.c.bf16 %v578, %v576
        %v597 = vpack.c.bf16 %v581, %v579
        %v598 = vpack.c.bf16 %v582, %v580
        %v599 = vld [vmem:[#allocation8] sm:$0xf]
        %v600 = vld [vmem:[#allocation8 + $0x4] sm:$0xf]
        %v601 = vld [vmem:[#allocation8 + $0x8] sm:$0xf]
        %v602 = vld [vmem:[#allocation8 + $0xc] sm:$0xf]
        %v603 = vld [vmem:[#allocation8 + $0x10] sm:$0xf]
        %v604 = vld [vmem:[#allocation8 + $0x14] sm:$0xf]
        %v605 = vld [vmem:[#allocation8 + $0x18] sm:$0xf]
        %v606 = vld [vmem:[#allocation8 + $0x1c] sm:$0xf]
        %v607 = vld [vmem:[#allocation8 + $0x20] sm:$0xf]
        %v608 = vld [vmem:[#allocation8 + $0x24] sm:$0xf]
        %v609 = vld [vmem:[#allocation8 + $0x28] sm:$0xf]
        %v610 = vld [vmem:[#allocation8 + $0x2c] sm:$0xf]
        %v611 = vld [vmem:[#allocation8 + $0x30] sm:$0xf]
        %v612 = vld [vmem:[#allocation8 + $0x34] sm:$0xf]
        %v613 = vld [vmem:[#allocation8 + $0x38] sm:$0xf]
        %v614 = vld [vmem:[#allocation8 + $0x3c] sm:$0xf]
        %v615 = vld [vmem:[#allocation8 + $0x40] sm:$0xf]
        %v616 = vld [vmem:[#allocation8 + $0x44] sm:$0xf]
        %v617 = vld [vmem:[#allocation8 + $0x48] sm:$0xf]
        %v618 = vld [vmem:[#allocation8 + $0x4c] sm:$0xf]
        %v619 = vld [vmem:[#allocation8 + $0x50] sm:$0xf]
        %v620 = vld [vmem:[#allocation8 + $0x54] sm:$0xf]
        %v621 = vld [vmem:[#allocation8 + $0x58] sm:$0xf]
        %v622 = vld [vmem:[#allocation8 + $0x5c] sm:$0xf]
        %v623 = vld [vmem:[#allocation8 + $0x60] sm:$0xf]
        %v624 = vld [vmem:[#allocation8 + $0x64] sm:$0xf]
        %v625 = vld [vmem:[#allocation8 + $0x68] sm:$0xf]
        %v626 = vld [vmem:[#allocation8 + $0x6c] sm:$0xf]
        %v627 = vld [vmem:[#allocation8 + $0x70] sm:$0xf]
        %v628 = vld [vmem:[#allocation8 + $0x74] sm:$0xf]
        %v629 = vld [vmem:[#allocation8 + $0x78] sm:$0xf]
        %v630 = vld [vmem:[#allocation8 + $0x7c] sm:$0xf]
        %v631 = vld [vmem:[%s4] sm:$0x1]
        %v633 = vperm.slane %v631, 0
        %v667 = vunpack.c.l.b16 %v599
        %v668 = vunpack.c.l.b16 %v600
        %v669 = vunpack.c.l.b16 %v601
        %v670 = vunpack.c.l.b16 %v602
        %v671 = vunpack.c.l.b16 %v603
        %v672 = vunpack.c.l.b16 %v604
        %v673 = vunpack.c.l.b16 %v605
        %v674 = vunpack.c.l.b16 %v606
        %v675 = vunpack.c.l.b16 %v607
        %v676 = vunpack.c.l.b16 %v608
        %v677 = vunpack.c.l.b16 %v609
        %v678 = vunpack.c.l.b16 %v610
        %v679 = vunpack.c.l.b16 %v611
        %v680 = vunpack.c.l.b16 %v612
        %v681 = vunpack.c.l.b16 %v613
        %v682 = vunpack.c.l.b16 %v614
        %v683 = vunpack.c.l.b16 %v615
        %v684 = vunpack.c.l.b16 %v616
        %v685 = vunpack.c.l.b16 %v617
        %v686 = vunpack.c.l.b16 %v618
        %v687 = vunpack.c.l.b16 %v619
        %v688 = vunpack.c.l.b16 %v620
        %v689 = vunpack.c.l.b16 %v621
        %v690 = vunpack.c.l.b16 %v622
        %v691 = vunpack.c.l.b16 %v623
        %v692 = vunpack.c.l.b16 %v624
        %v693 = vunpack.c.l.b16 %v625
        %v694 = vunpack.c.l.b16 %v626
        %v695 = vunpack.c.l.b16 %v627
        %v696 = vunpack.c.l.b16 %v628
        %v697 = vunpack.c.l.b16 %v629
        %v698 = vunpack.c.l.b16 %v630
        %v699 = vpack.c.b16 %v668, %v667
        %v700 = vpack.c.b16 %v670, %v669
        %v701 = vpack.c.b16 %v672, %v671
        %v702 = vpack.c.b16 %v674, %v673
        %v703 = vpack.c.b16 %v676, %v675
        %v704 = vpack.c.b16 %v678, %v677
        %v705 = vpack.c.b16 %v680, %v679
        %v706 = vpack.c.b16 %v682, %v681
        %v707 = vpack.c.b16 %v684, %v683
        %v708 = vpack.c.b16 %v686, %v685
        %v709 = vpack.c.b16 %v688, %v687
        %v710 = vpack.c.b16 %v690, %v689
        %v711 = vpack.c.b16 %v692, %v691
        %v712 = vpack.c.b16 %v694, %v693
        %v713 = vpack.c.b16 %v696, %v695
        %v714 = vpack.c.b16 %v698, %v697
        %731 = vmatpush.bf16.msra.mxu0 %v706
        %732 = vmatpush.bf16.msra.mxu0 %v705
        %733 = vmatpush.bf16.msra.mxu0 %v704
        %734 = vmatpush.bf16.msra.mxu0 %v703
        %735 = vmatpush.bf16.msra.mxu0 %v702
        %736 = vmatpush.bf16.msra.mxu0 %v701
        %737 = vmatpush.bf16.msra.mxu0 %v700
        %738 = vmatpush.bf16.msra.mxu0 %v699
        %739 = vmatmul.bf16.gmra.mxu0 %v583
        %v740 = vpop.f32.mrf.mxu0
        %v741 = vadd.f32 %v633, %v740
        %v742 = vpop.f32.mrf.mxu0
        %v743 = vadd.f32 %v633, %v742
        %744 = vmatmul.bf16.gmra.mxu0 %v585
        %v745 = vpop.f32.mrf.mxu0
        %v746 = vadd.f32 %v633, %v745
        %v747 = vpop.f32.mrf.mxu0
        %v748 = vadd.f32 %v633, %v747
        %749 = vmatmul.bf16.gmra.mxu0 %v587
        %v750 = vpop.f32.mrf.mxu0
        %v751 = vadd.f32 %v633, %v750
        %v752 = vpop.f32.mrf.mxu0
        %v753 = vadd.f32 %v633, %v752
        %754 = vmatmul.bf16.gmra.mxu0 %v589
        %v755 = vpop.f32.mrf.mxu0
        %v756 = vadd.f32 %v633, %v755
        %v757 = vpop.f32.mrf.mxu0
        %v758 = vadd.f32 %v633, %v757
        %759 = vmatmul.bf16.gmra.mxu0 %v591
        %v760 = vpop.f32.mrf.mxu0
        %v761 = vadd.f32 %v633, %v760
        %v762 = vpop.f32.mrf.mxu0
        %v763 = vadd.f32 %v633, %v762
        %764 = vmatmul.bf16.gmra.mxu0 %v593
        %v765 = vpop.f32.mrf.mxu0
        %v766 = vadd.f32 %v633, %v765
        %v767 = vpop.f32.mrf.mxu0
        %v768 = vadd.f32 %v633, %v767
        %769 = vmatmul.bf16.gmra.mxu0 %v595
        %v770 = vpop.f32.mrf.mxu0
        %v771 = vadd.f32 %v633, %v770
        %v772 = vpop.f32.mrf.mxu0
        %v773 = vadd.f32 %v633, %v772
        %774 = vmatmul.bf16.gmra.mxu0 %v597
        %v775 = vpop.f32.mrf.mxu0
        %v776 = vadd.f32 %v633, %v775
        %v777 = vpop.f32.mrf.mxu0
        %v778 = vadd.f32 %v633, %v777
        %779 = vdwg.mxu0
        %780 = vmatpush.bf16.msra.mxu0 %v714
        %781 = vmatpush.bf16.msra.mxu0 %v713
        %782 = vmatpush.bf16.msra.mxu0 %v712
        %783 = vmatpush.bf16.msra.mxu0 %v711
        %784 = vmatpush.bf16.msra.mxu0 %v710
        %785 = vmatpush.bf16.msra.mxu0 %v709
        %786 = vmatpush.bf16.msra.mxu0 %v708
        %787 = vmatpush.bf16.msra.mxu0 %v707
        %788 = vmatmul.bf16.gmra.mxu0 %v584
        %v789 = vpop.f32.mrf.mxu0
        %v790 = vadd.f32 %v741, %v789
        %v791 = vpop.f32.mrf.mxu0
        %v792 = vadd.f32 %v743, %v791
        %793 = vmatmul.bf16.gmra.mxu0 %v586
        %v794 = vpop.f32.mrf.mxu0
        %v795 = vadd.f32 %v746, %v794
        %v796 = vpop.f32.mrf.mxu0
        %v797 = vadd.f32 %v748, %v796
        %798 = vmatmul.bf16.gmra.mxu0 %v588
        %v799 = vpop.f32.mrf.mxu0
        %v800 = vadd.f32 %v751, %v799
        %v801 = vpop.f32.mrf.mxu0
        %v802 = vadd.f32 %v753, %v801
        %803 = vmatmul.bf16.gmra.mxu0 %v590
        %v804 = vpop.f32.mrf.mxu0
        %v805 = vadd.f32 %v756, %v804
        %v806 = vpop.f32.mrf.mxu0
        %v807 = vadd.f32 %v758, %v806
        %808 = vmatmul.bf16.gmra.mxu0 %v592
        %v809 = vpop.f32.mrf.mxu0
        %v810 = vadd.f32 %v761, %v809
        %v811 = vpop.f32.mrf.mxu0
        %v812 = vadd.f32 %v763, %v811
        %813 = vmatmul.bf16.gmra.mxu0 %v594
        %v814 = vpop.f32.mrf.mxu0
        %v815 = vadd.f32 %v766, %v814
        %v816 = vpop.f32.mrf.mxu0
        %v817 = vadd.f32 %v768, %v816
        %818 = vmatmul.bf16.gmra.mxu0 %v596
        %v819 = vpop.f32.mrf.mxu0
        %v820 = vadd.f32 %v771, %v819
        %v821 = vpop.f32.mrf.mxu0
        %v822 = vadd.f32 %v773, %v821
        %823 = vmatmul.bf16.gmra.mxu0 %v598
        %v824 = vpop.f32.mrf.mxu0
        %v825 = vadd.f32 %v776, %v824
        %v826 = vpop.f32.mrf.mxu0
        %v827 = vadd.f32 %v778, %v826
        %828 = vdwg.mxu0
        %829 = vst [vmem:[%s292] sm:$0xff] %v790
        %830 = vst [vmem:[%s292 + $0x8] sm:$0xff] %v792
        %831 = vst [vmem:[%s292 + $0x10] sm:$0xff] %v795
        %832 = vst [vmem:[%s292 + $0x18] sm:$0xff] %v797
        %833 = vst [vmem:[%s292 + $0x20] sm:$0xff] %v800
        %834 = vst [vmem:[%s292 + $0x28] sm:$0xff] %v802
        %835 = vst [vmem:[%s292 + $0x30] sm:$0xff] %v805
        %836 = vst [vmem:[%s292 + $0x38] sm:$0xff] %v807
        %837 = vst [vmem:[%s292 + $0x40] sm:$0xff] %v810
        %838 = vst [vmem:[%s292 + $0x48] sm:$0xff] %v812
        %839 = vst [vmem:[%s292 + $0x50] sm:$0xff] %v815
        %840 = vst [vmem:[%s292 + $0x58] sm:$0xff] %v817
        %841 = vst [vmem:[%s292 + $0x60] sm:$0xff] %v820
        %842 = vst [vmem:[%s292 + $0x68] sm:$0xff] %v822
        %843 = vst [vmem:[%s292 + $0x70] sm:$0xff] %v825
        %844 = vst [vmem:[%s292 + $0x78] sm:$0xff] %v827
        %s845 = sand.u32 %s142, 1
        %s846 = scalar_lea.sflag [#allocation4], %s845
        %s847 = sand.u32 %s142, 1
        %s848 = smul.addr %s847, 128
        %s849 = scalar_lea.vmem [#allocation10], %s848
        // Predicated region
        $region57: #{tpu_custom_call.1} parent=39 // pred_check
          %p850 = pneg %p152
        $region58: #{tpu_custom_call.1} parent=39 // pred_check_branch
          %852 = sbr.rel (%p850) target = $region60
        $region59: #{tpu_custom_call.1} parent=39 // pred_region
          %s853 = smul.u32 16, %s24
          %855 = vsyncadd %s846, 0
          %s856 = smul.addr %s853, 8
          %s857 = scalar_lea.hbm %s5, %s856
          %s858 = sshll.u32 %s849, 4
          %s859 = int_to_ptr.vmem [resolvable:$true] %s858
          %s860 = sshll.u32 %s857, 4
          %s861 = int_to_ptr.hbm [resolvable:$true] %s860
          %866 = dma.vmem_to_hbm [thread:$0]  %s859, 2048, %s861, %s846, 128, 128, 8
        $region60: #{tpu_custom_call.1} parent=39 // pred_fallthru
          _
      $region40: #{tpu_custom_call.1} parent=5 // pred_fallthru
        _
      %p867 = scmp.le.s32.totalorder 2, %s19
      // Predicated region
      $region61: #{tpu_custom_call.1} parent=5 // pred_check
        %p868 = pneg %p867
      $region62: #{tpu_custom_call.1} parent=5 // pred_check_branch
        %870 = sbr.rel (%p868) target = $region64
      $region63: #{tpu_custom_call.1} parent=5 // pred_region
        %s871 = ssub.s32 %s19, 2
        // Predicated region
        $region65: #{tpu_custom_call.1} parent=63 // pred_check
          %p872 = pneg %p158
        $region66: #{tpu_custom_call.1} parent=63 // pred_check_branch
          %874 = sbr.rel (%p872) target = $region68
        $region67: #{tpu_custom_call.1} parent=63 // pred_region
          %s875 = sand.u32 %s143, 1
          %s876 = scalar_lea.sflag [#allocation4], %s875
          %s877 = sand.u32 %s143, 1
          %s878 = smul.addr %s877, 128
          %s879 = scalar_lea.vmem [#allocation10], %s878
          %881 = dma.done %s876, 2048
        $region68: #{tpu_custom_call.1} parent=63 // pred_fallthru
          _
      $region64: #{tpu_custom_call.1} parent=5 // pred_fallthru
        _
    $region6: #{tpu_custom_call.1} parent=1 // loop_footer
      %s23 = sadd.s32 1, %s19
    $region7: #{tpu_custom_call.1} parent=1 // loop_footer_branch
      %18 = sbr.rel target = $region3
    $region8: #{tpu_custom_call.1} parent=1 // loop_exit
      _
    %882 = vsyncpa [#allocation3], 1
    %s883 = scalar_lea.sflag [#allocation3], 1
    %884 = vsyncpa %s883, 1
    %885 = vsyncpa [#allocation6], 1
    %886 = vsyncpa [#allocation9], 1
    %887 = vsyncpa [#allocation4], 1
    %s888 = scalar_lea.sflag [#allocation4], 1
    %889 = vsyncpa %s888, 1

</llo_original>
